<compile_context>
chip_gen: v7x
topology: tpu7x:2x2x1
jax: 0.10.0
libtpu: 0.0.40
codegen_flags: <defaults>
</compile_context>

<pallas_src>
import functools

import jax
import jax.numpy as jnp
from jax import lax
from jax.experimental import pallas as pl
from jax.experimental.pallas import tpu as pltpu


def _edge_coefficients(idx, n):
    """Per-position coefficients for torch.gradient (spacing=1, edge_order=1).

    g[j] = c_next[j]*x[j+1] + c_prev[j]*x[j-1] + c_self[j]*x[j]
      interior : (x[j+1] - x[j-1]) / 2
      idx == 0 : x[1] - x[0]
      idx == n-1 : x[n-1] - x[n-2]
    """
    c_next = jnp.where(idx == 0, 1.0, jnp.where(idx == n - 1, 0.0, 0.5))
    c_prev = jnp.where(idx == 0, 0.0, jnp.where(idx == n - 1, -1.0, -0.5))
    c_self = jnp.where(idx == 0, -1.0, jnp.where(idx == n - 1, 1.0, 0.0))
    return c_next, c_prev, c_self


def _loss_partials_kernel(coef_ref, x_ref, t_ref, out_ref, *, w, nc, tb, ragged):
    """One grid step: partial sums for a (tb, H*W) slab of flattened images.

    coef_ref : (8, HW) per-column gradient coefficients (rows 0..5 used).
    x_ref/t_ref : (tb, HW) tiles of flattened inputs / targets (native dtype).
    out_ref : (1, 8, 128) lane-dense partials; sublane row 0 = sum(d^2),
              row 1 = sum(gW^2 + gH^2).
    """
    x = x_ref[...].astype(jnp.float32)
    t = t_ref[...].astype(jnp.float32)
    d = x - t                       # gradient is linear: grad(x)-grad(t)==grad(d)

    if ragged:
        # Zero rows past the end of the N*C axis in the boundary block; zero
        # rows contribute nothing to any of the sums (this also scrubs any
        # undefined data read for the out-of-bounds part of the block).
        rows = lax.broadcasted_iota(jnp.int32, d.shape, 0)
        d = jnp.where(rows < nc - pl.program_id(0) * tb, d, 0.0)

    hw = d.shape[1]
    d_e = pltpu.roll(d, hw - 1, axis=1)   # d[j+1]  (w+1, same image row)
    d_w = pltpu.roll(d, 1, axis=1)        # d[j-1]  (w-1)
    d_s = pltpu.roll(d, hw - w, axis=1)   # d[j+W]  (h+1)
    d_n = pltpu.roll(d, w, axis=1)        # d[j-W]  (h-1)

    c = coef_ref[...]
    g_w = c[0:1, :] * d_e + c[1:2, :] * d_w + c[2:3, :] * d   # torch dim=3
    g_h = c[3:4, :] * d_s + c[4:5, :] * d_n + c[5:6, :] * d   # torch dim=2

    s0 = jnp.sum(d * d)                   # MSE numerator
    s12 = jnp.sum(g_w * g_w + g_h * g_h)  # both gradient-diff sums combined

    row = lax.broadcasted_iota(jnp.int32, (8, 128), 0)
    out_ref[0] = jnp.where(row == 0, s0, jnp.where(row == 1, s12, 0.0))


@functools.partial(jax.jit, static_argnames=("b1", "b2"))
def custom_loss(inputs, targets, b1=0.5, b2=0.01):
    """Pallas implementation of custom_loss.forward(inputs, targets)."""
    assert inputs.shape == targets.shape and inputs.ndim == 4
    N, C, H, W = inputs.shape
    assert H >= 2 and W >= 2, "torch.gradient needs >= 2 points along each dim"
    NC, HW = N * C, H * W

    # Lane-dense view: flattened image is the lane axis.  Free reshape for
    # contiguous NCHW; inputs keep their native dtype in HBM.
    x = inputs.reshape(NC, HW)
    t = targets.reshape(NC, HW)

    # ---- Tile sizing (counts (8,128)-padded VMEM bytes) --------------------
    elem_bytes = jnp.dtype(x.dtype).itemsize
    lane_padded = pl.cdiv(HW, 128) * 128
    row_bytes = lane_padded * elem_bytes
    budget = 4 << 20                                    # per input, per buffer
    tb_cap = max(8, (budget // row_bytes) // 8 * 8)
    tb_split = max(8, (pl.cdiv(NC, 4) + 7) // 8 * 8)    # aim for >= 4 grid steps
    tb = min(tb_cap, tb_split)
    if tb >= NC:
        tb = NC                                         # one block == full axis
    num_blocks = pl.cdiv(NC, tb)
    ragged = (NC % tb) != 0

    # VMEM: x + t double-buffered blocks + coef + partials, with 2x headroom,
    # clamped to [16 MiB, 48 MiB] (fits all generations' scoped/physical VMEM).
    block_bytes = pl.cdiv(tb, 8) * 8 * lane_padded * elem_bytes
    vmem_bytes = 4 * block_bytes + 2 * 8 * lane_padded * 4 + 2 * 8 * 128 * 4
    vmem_limit = int(min(max(2 * vmem_bytes, 16 << 20), 48 << 20))

    # ---- Per-column gradient coefficients (constants under jit) ------------
    col = jnp.arange(HW, dtype=jnp.int32)
    cwn, cwp, cws = _edge_coefficients(col % W, W)      # along W (torch dim=3)
    chn, chp, chs = _edge_coefficients(col // W, H)     # along H (torch dim=2)
    zeros = jnp.zeros((HW,), jnp.float32)
    coef = jnp.stack([cwn, cwp, cws, chn, chp, chs, zeros, zeros]
                     ).astype(jnp.float32)              # (8, HW)

    kernel = functools.partial(_loss_partials_kernel,
                               w=W, nc=NC, tb=tb, ragged=ragged)

    # TODO(synk): optional bf16 fast path (keep d / shifts in bf16 on v6e/v7x,
    # upcast only at the square-accumulate step); f32 math kept for v5e.
    partials = pl.pallas_call(
        kernel,
        out_shape=jax.ShapeDtypeStruct((num_blocks, 8, 128), jnp.float32),
        grid_spec=pltpu.PrefetchScalarGridSpec(
            num_scalar_prefetch=0,
            grid=(num_blocks,),
            in_specs=[
                pl.BlockSpec((8, HW), lambda i: (0, 0)),     # coefficients
                pl.BlockSpec((tb, HW), lambda i: (i, 0)),    # inputs
                pl.BlockSpec((tb, HW), lambda i: (i, 0)),    # targets
            ],
            out_specs=pl.BlockSpec((1, 8, 128), lambda i: (i, 0, 0)),
        ),
        compiler_params=pltpu.CompilerParams(
            dimension_semantics=("parallel",),   # independent per-block partials
            vmem_limit_bytes=vmem_limit,
        ),
    )(coef, x, t)

    sums = jnp.sum(partials, axis=0)          # (8, 128)
    s0 = sums[0, 0]                           # sum (x - t)^2
    s12 = sums[1, 0]                          # sum (ix-tx)^2 + (iy-ty)^2

    total = float(NC * HW)
    L1 = b1 * s0 / total
    L2 = b2 * s12 / total
    # L_1 + L_2 / 10 ** ceil(log10(L_2 / L_1)).
    # (inputs == targets gives 0/0 -> NaN, same as the PyTorch reference.)
    return (L1 + L2 / (10.0 ** jnp.ceil(jnp.log10(L2 / L1)))).astype(jnp.float32)


def _reference_loss(inputs, targets, b1=0.5, b2=0.01):
    """Pure-JAX reference mirroring the PyTorch module."""
    L1 = b1 * jnp.mean((inputs - targets) ** 2.0)
    ix = jnp.gradient(inputs, axis=2)
    iy = jnp.gradient(inputs, axis=3)
    tx = jnp.gradient(targets, axis=2)
    ty = jnp.gradient(targets, axis=3)
    L2 = b2 * jnp.mean((ix - tx) ** 2.0) + b2 * jnp.mean((iy - ty) ** 2.0)
    return L1 + L2 / 10.0 ** jnp.ceil(jnp.log10(L2 / L1))


if __name__ == "__main__":
    key = jax.random.PRNGKey(0)
    k1, k2 = jax.random.split(key)
    # Small NCHW shapes consistent with the module's usage (image-like tensors).
    inputs = jax.random.normal(k1, (2, 4, 16, 16), dtype=jnp.float32)
    targets = jax.random.normal(k2, (2, 4, 16, 16), dtype=jnp.float32)

    loss = custom_loss(inputs, targets)
    jax.block_until_ready(loss)

    ref = _reference_loss(inputs, targets)
    jax.block_until_ready(ref)
    assert jnp.allclose(loss, ref, rtol=1e-4, atol=1e-6), (loss, ref)

    print("KERNEL_OK")
</pallas_src>

<mosaic_0001>
module attributes {stable_mosaic.version = 11 : i64} {
  func.func @_loss_partials_kernel(%arg0: i32, %arg1: memref<8x256xf32, #tpu.memory_space<vmem>>, %arg2: memref<8x256xf32, #tpu.memory_space<vmem>>, %arg3: memref<8x256xf32, #tpu.memory_space<vmem>>, %arg4: memref<1x8x128xf32, #tpu.memory_space<vmem>>) attributes {dimension_semantics = [#tpu.dimension_semantics<parallel>], iteration_bounds = array<i64: 1>, scalar_prefetch = 0 : i64, scratch_operands = 0 : i64, tpu.core_type = #tpu.core_type<tc>, window_params = [{pipeline_mode = #tpu.pipeline_mode<synchronous>, transform_indices = @transform_0, window_bounds = array<i64: 8, 256>}, {transform_indices = @transform_1, window_bounds = array<i64: 8, 256>}, {transform_indices = @transform_2, window_bounds = array<i64: 8, 256>}, {transform_indices = @transform_3, window_bounds = array<i64: 1, 8, 128>}]} {
    %c0 = arith.constant 0 : index
    %c0_0 = arith.constant 0 : index
    %0 = vector.load %arg2[%c0, %c0_0] : memref<8x256xf32, #tpu.memory_space<vmem>>, vector<8x256xf32>
    %c0_1 = arith.constant 0 : index
    %c0_2 = arith.constant 0 : index
    %1 = vector.load %arg3[%c0_1, %c0_2] : memref<8x256xf32, #tpu.memory_space<vmem>>, vector<8x256xf32>
    %2 = arith.subf %0, %1 : vector<8x256xf32>
    %c255_i32 = arith.constant 255 : i32
    %3 = tpu.dynamic_rotate %2 by %c255_i32 dim 1 : vector<8x256xf32>, i32 -> vector<8x256xf32>
    %c1_i32 = arith.constant 1 : i32
    %4 = tpu.dynamic_rotate %2 by %c1_i32 dim 1 : vector<8x256xf32>, i32 -> vector<8x256xf32>
    %c240_i32 = arith.constant 240 : i32
    %5 = tpu.dynamic_rotate %2 by %c240_i32 dim 1 : vector<8x256xf32>, i32 -> vector<8x256xf32>
    %c16_i32 = arith.constant 16 : i32
    %6 = tpu.dynamic_rotate %2 by %c16_i32 dim 1 : vector<8x256xf32>, i32 -> vector<8x256xf32>
    %c0_3 = arith.constant 0 : index
    %c0_4 = arith.constant 0 : index
    %7 = vector.load %arg1[%c0_3, %c0_4] : memref<8x256xf32, #tpu.memory_space<vmem>>, vector<8x256xf32>
    %8 = vector.extract_strided_slice %7 {offsets = [0, 0], sizes = [1, 256], strides = [1, 1]} : vector<8x256xf32> to vector<1x256xf32>
    %9 = vector.broadcast %8 : vector<1x256xf32> to vector<8x256xf32>
    %10 = arith.mulf %9, %3 : vector<8x256xf32>
    %11 = vector.extract_strided_slice %7 {offsets = [1, 0], sizes = [1, 256], strides = [1, 1]} : vector<8x256xf32> to vector<1x256xf32>
    %12 = vector.broadcast %11 : vector<1x256xf32> to vector<8x256xf32>
    %13 = arith.mulf %12, %4 : vector<8x256xf32>
    %14 = arith.addf %10, %13 : vector<8x256xf32>
    %15 = vector.extract_strided_slice %7 {offsets = [2, 0], sizes = [1, 256], strides = [1, 1]} : vector<8x256xf32> to vector<1x256xf32>
    %16 = vector.broadcast %15 : vector<1x256xf32> to vector<8x256xf32>
    %17 = arith.mulf %16, %2 : vector<8x256xf32>
    %18 = arith.addf %14, %17 : vector<8x256xf32>
    %19 = vector.extract_strided_slice %7 {offsets = [3, 0], sizes = [1, 256], strides = [1, 1]} : vector<8x256xf32> to vector<1x256xf32>
    %20 = vector.broadcast %19 : vector<1x256xf32> to vector<8x256xf32>
    %21 = arith.mulf %20, %5 : vector<8x256xf32>
    %22 = vector.extract_strided_slice %7 {offsets = [4, 0], sizes = [1, 256], strides = [1, 1]} : vector<8x256xf32> to vector<1x256xf32>
    %23 = vector.broadcast %22 : vector<1x256xf32> to vector<8x256xf32>
    %24 = arith.mulf %23, %6 : vector<8x256xf32>
    %25 = arith.addf %21, %24 : vector<8x256xf32>
    %26 = vector.extract_strided_slice %7 {offsets = [5, 0], sizes = [1, 256], strides = [1, 1]} : vector<8x256xf32> to vector<1x256xf32>
    %27 = vector.broadcast %26 : vector<1x256xf32> to vector<8x256xf32>
    %28 = arith.mulf %27, %2 : vector<8x256xf32>
    %29 = arith.addf %25, %28 : vector<8x256xf32>
    %30 = arith.mulf %2, %2 : vector<8x256xf32>
    %31 = vector.shape_cast %30 : vector<8x256xf32> to vector<1x8x256xf32>
    %cst = arith.constant dense<0.000000e+00> : vector<1xf32>
    %32 = vector.multi_reduction <add>, %31, %cst [1, 2] : vector<1x8x256xf32> to vector<1xf32>
    %33 = vector.shape_cast %32 : vector<1xf32> to vector<1x1x1xf32>
    %34 = vector.extract %33[0, 0, 0] : f32 from vector<1x1x1xf32>
    %35 = arith.mulf %18, %18 : vector<8x256xf32>
    %36 = arith.mulf %29, %29 : vector<8x256xf32>
    %37 = arith.addf %35, %36 : vector<8x256xf32>
    %38 = vector.shape_cast %37 : vector<8x256xf32> to vector<1x8x256xf32>
    %cst_5 = arith.constant dense<0.000000e+00> : vector<1xf32>
    %39 = vector.multi_reduction <add>, %38, %cst_5 [1, 2] : vector<1x8x256xf32> to vector<1xf32>
    %40 = vector.shape_cast %39 : vector<1xf32> to vector<1x1x1xf32>
    %41 = vector.extract %40[0, 0, 0] : f32 from vector<1x1x1xf32>
    %42 = tpu.iota {dimensions = array<i32: 0>} : vector<8x128xi32>
    %c0_i32 = arith.constant 0 : i32
    %43 = vector.broadcast %c0_i32 : i32 to vector<8x128xi32>
    %44 = arith.cmpi eq, %42, %43 : vector<8x128xi32>
    %c1_i32_6 = arith.constant 1 : i32
    %45 = vector.broadcast %c1_i32_6 : i32 to vector<8x128xi32>
    %46 = arith.cmpi eq, %42, %45 : vector<8x128xi32>
    %cst_7 = arith.constant 0.000000e+00 : f32
    %47 = vector.broadcast %41 : f32 to vector<8x128xf32>
    %48 = vector.broadcast %cst_7 : f32 to vector<8x128xf32>
    %49 = arith.select %46, %47, %48 : vector<8x128xi1>, vector<8x128xf32>
    %50 = vector.broadcast %34 : f32 to vector<8x128xf32>
    %51 = arith.select %44, %50, %49 : vector<8x128xi1>, vector<8x128xf32>
    %c0_8 = arith.constant 0 : index
    %c0_9 = arith.constant 0 : index
    %c0_10 = arith.constant 0 : index
    %52 = vector.load %arg4[%c0_8, %c0_9, %c0_10] : memref<1x8x128xf32, #tpu.memory_space<vmem>>, vector<1x8x128xf32>
    %53 = vector.shape_cast %52 : vector<1x8x128xf32> to vector<8x128xf32>
    %54 = vector.shape_cast %51 : vector<8x128xf32> to vector<1x8x128xf32>
    tpu.vector_store %arg4[%c0_8, %c0_9, %c0_10], %54 {strides = array<i32>} : memref<1x8x128xf32, #tpu.memory_space<vmem>>, vector<1x8x128xf32>,
    return
  }
  func.func @transform_0(%arg0: i32) -> (i32, i32) {
    %c0_i32 = arith.constant 0 : i32
    %c0_i32_0 = arith.constant 0 : i32
    %c0_i32_1 = arith.constant 0 : i32
    return %c0_i32, %c0_i32_0 : i32, i32
  }
  func.func @transform_1(%arg0: i32) -> (i32, i32) {
    %c0_i32 = arith.constant 0 : i32
    %c0_i32_0 = arith.constant 0 : i32
    return %arg0, %c0_i32 : i32, i32
  }
  func.func @transform_2(%arg0: i32) -> (i32, i32) {
    %c0_i32 = arith.constant 0 : i32
    %c0_i32_0 = arith.constant 0 : i32
    return %arg0, %c0_i32 : i32, i32
  }
  func.func @transform_3(%arg0: i32) -> (i32, i32, i32) {
    %c0_i32 = arith.constant 0 : i32
    %c0_i32_0 = arith.constant 0 : i32
    %c0_i32_1 = arith.constant 0 : i32
    return %arg0, %c0_i32, %c0_i32_0 : i32, i32, i32
  }
}

</mosaic_0001>

<llo_original>
// kernel: custom_loss.1
$region0: #{custom_loss.1}
  #allocation0 [shape = 'u32[]', space=smem, size = 0x4, offset = 0x4, fixed_abs, tag = 'smem constant byte address 0x4 - core index']
  #allocation1 [shape = 'u32[144,128]{1,0:T(1,128)}', space=vmem, size = 0x12000, scoped, tag = 'internal scratch']
  %s0 = inlined_call_operand.vmem [shape: f32[8,256], index: 0, kind: input, shape index: {}]
  %s1 = inlined_call_operand.vmem [shape: f32[8,256], index: 1, kind: input, shape index: {}]
  %s2 = inlined_call_operand.vmem [shape: f32[8,256], index: 2, kind: input, shape index: {}]
  %s3 = inlined_call_operand.vmem [shape: f32[1,8,128], index: 3, kind: output, shape index: {}]
  %s4 = sld [smem:[#allocation0]]
  $region22: #{custom_loss.1} parent=0
    _
  %s6 = ssub.s32 1, %s4
  %s7 = scalar_select 0, %s6, %s4
  // Predicated region
  $region2: #{custom_loss.1} parent=0 // pred_check
    _
  $region3: #{custom_loss.1} parent=0 // pred_check_branch
    %9 = sbr.rel (0) target = $region5
  $region4: #{custom_loss.1} parent=0 // pred_region
    _
  $region5: #{custom_loss.1} parent=0 // pred_fallthru
    _
  // Predicated region
  $region6: #{custom_loss.1} parent=0 // pred_check
    _
  $region7: #{custom_loss.1} parent=0 // pred_check_branch
    %11 = sbr.rel (0) target = $region9
  $region8: #{custom_loss.1} parent=0 // pred_region
    _
  $region9: #{custom_loss.1} parent=0 // pred_fallthru
    _
  // Predicated region
  $region10: #{custom_loss.1} parent=0 // pred_check
    _
  $region11: #{custom_loss.1} parent=0 // pred_check_branch
    %13 = sbr.rel (0) target = $region13
  $region12: #{custom_loss.1} parent=0 // pred_region
    _
  $region13: #{custom_loss.1} parent=0 // pred_fallthru
    _
  %v14 = vld [vmem:[%s1] sm:$0xff]
  %v15 = vld [vmem:[%s1 + $0x8] sm:$0xff]
  %v16 = vld [vmem:[%s2] sm:$0xff]
  %v17 = vld [vmem:[%s2 + $0x8] sm:$0xff]
  %v18 = vsub.f32 %v14, %v16
  %v19 = vsub.f32 %v15, %v17
  %20 = vrot.lane.b32.xlu0 %v18, 127
  %v21 = vpop.permute.xlu0 %20
  %22 = vrot.lane.b32.xlu0 %v19, 127
  %v23 = vpop.permute.xlu0 %22
  %v24 = vlaneseq
  %v25 = vand.u32 %v24, 127
  %vm26 = vcmp.lt.s32.totalorder %v25, 127
  %v27 = vsel %vm26, %v21, %v23
  %v28 = vsel %vm26, %v23, %v21
  %29 = vrot.lane.b32.xlu0 %v18, 1
  %v30 = vpop.permute.xlu0 %29
  %31 = vrot.lane.b32.xlu0 %v19, 1
  %v32 = vpop.permute.xlu0 %31
  %vm33 = vcmp.lt.s32.totalorder %v25, 1
  %v34 = vsel %vm33, %v30, %v32
  %v35 = vsel %vm33, %v32, %v30
  %36 = vrot.lane.b32.xlu0 %v18, 112
  %v37 = vpop.permute.xlu0 %36
  %38 = vrot.lane.b32.xlu0 %v19, 112
  %v39 = vpop.permute.xlu0 %38
  %vm40 = vcmp.lt.s32.totalorder %v25, 112
  %v41 = vsel %vm40, %v37, %v39
  %v42 = vsel %vm40, %v39, %v37
  %43 = vrot.lane.b32.xlu0 %v18, 16
  %v44 = vpop.permute.xlu0 %43
  %45 = vrot.lane.b32.xlu0 %v19, 16
  %v46 = vpop.permute.xlu0 %45
  %vm47 = vcmp.lt.s32.totalorder %v25, 16
  %v48 = vsel %vm47, %v44, %v46
  %v49 = vsel %vm47, %v46, %v44
  %v50 = vld [vmem:[%s0] sm:$0xff]
  %v51 = vld [vmem:[%s0 + $0x8] sm:$0xff]
  %v52 = vlaneseq
  %v53 = vshrl.u32 %v52, 7
  %v54 = vsub.s32 0, %v53
  %v55 = vrot.slane %v50, %v54
  %v56 = vlaneseq
  %v57 = vshrl.u32 %v56, 7
  %v58 = vsub.s32 0, %v57
  %v59 = vrot.slane %v51, %v58
  %v60 = vmul.f32 %v55, %v27
  %v61 = vmul.f32 %v59, %v28
  %v62 = vlaneseq
  %v63 = vshrl.u32 %v62, 7
  %v64 = vsub.s32 1, %v63
  %v65 = vrot.slane %v50, %v64
  %v66 = vlaneseq
  %v67 = vshrl.u32 %v66, 7
  %v68 = vsub.s32 1, %v67
  %v69 = vrot.slane %v51, %v68
  %v70 = vmul.f32 %v65, %v35
  %v71 = vmul.f32 %v69, %v34
  %v72 = vadd.f32 %v60, %v70
  %v73 = vadd.f32 %v61, %v71
  %v74 = vlaneseq
  %v75 = vshrl.u32 %v74, 7
  %v76 = vsub.s32 2, %v75
  %v77 = vrot.slane %v50, %v76
  %v78 = vlaneseq
  %v79 = vshrl.u32 %v78, 7
  %v80 = vsub.s32 2, %v79
  %v81 = vrot.slane %v51, %v80
  %v82 = vmul.f32 %v77, %v18
  %v83 = vmul.f32 %v81, %v19
  %v84 = vadd.f32 %v72, %v82
  %v85 = vadd.f32 %v73, %v83
  %v86 = vlaneseq
  %v87 = vshrl.u32 %v86, 7
  %v88 = vsub.s32 3, %v87
  %v89 = vrot.slane %v50, %v88
  %v90 = vlaneseq
  %v91 = vshrl.u32 %v90, 7
  %v92 = vsub.s32 3, %v91
  %v93 = vrot.slane %v51, %v92
  %v94 = vmul.f32 %v89, %v41
  %v95 = vmul.f32 %v93, %v42
  %v96 = vlaneseq
  %v97 = vshrl.u32 %v96, 7
  %v98 = vsub.s32 4, %v97
  %v99 = vrot.slane %v50, %v98
  %v100 = vlaneseq
  %v101 = vshrl.u32 %v100, 7
  %v102 = vsub.s32 4, %v101
  %v103 = vrot.slane %v51, %v102
  %v104 = vmul.f32 %v99, %v49
  %v105 = vmul.f32 %v103, %v48
  %v106 = vadd.f32 %v94, %v104
  %v107 = vadd.f32 %v95, %v105
  %v108 = vlaneseq
  %v109 = vshrl.u32 %v108, 7
  %v110 = vsub.s32 5, %v109
  %v111 = vrot.slane %v50, %v110
  %v112 = vlaneseq
  %v113 = vshrl.u32 %v112, 7
  %v114 = vsub.s32 5, %v113
  %v115 = vrot.slane %v51, %v114
  %v116 = vmul.f32 %v111, %v18
  %v117 = vmul.f32 %v115, %v19
  %v118 = vadd.f32 %v106, %v116
  %v119 = vadd.f32 %v107, %v117
  %v120 = vmul.f32 %v18, %v18
  %v121 = vmul.f32 %v19, %v19
  %v122 = vadd.f32 %v120, %v121
  %123 = vadd.xlane.f32.xlu0 %v122
  %v124 = vpop.xlane.xlu0 %123
  %v125 = vrot.slane %v124, 4
  %v126 = vadd.f32 %v124, %v125
  %v127 = vrot.slane %v126, 2
  %v128 = vadd.f32 %v126, %v127
  %v129 = vrot.slane %v128, 1
  %v130 = vadd.f32 %v128, %v129
  %s131 = vtos %v130
  %v132 = vmul.f32 %v84, %v84
  %v133 = vmul.f32 %v85, %v85
  %v134 = vmul.f32 %v118, %v118
  %v135 = vmul.f32 %v119, %v119
  %v136 = vadd.f32 %v132, %v134
  %v137 = vadd.f32 %v133, %v135
  %v138 = vadd.f32 %v136, %v137
  %139 = vadd.xlane.f32.xlu0 %v138
  %v140 = vpop.xlane.xlu0 %139
  %v141 = vrot.slane %v140, 4
  %v142 = vadd.f32 %v140, %v141
  %v143 = vrot.slane %v142, 2
  %v144 = vadd.f32 %v142, %v143
  %v145 = vrot.slane %v144, 1
  %v146 = vadd.f32 %v144, %v145
  %s147 = vtos %v146
  %v148 = vlaneseq
  %v149 = vshrl.u32 %v148, 7
  %vm150 = vcmp.eq.s32.totalorder %v149, 0
  %vm151 = vcmp.eq.s32.totalorder %v149, 1
  %v152 = vstv %s147
  %v153 = vsel %vm151, %v152, 0.0
  %v154 = vstv %s131
  %v155 = vsel %vm150, %v154, %v153
  %156 = vst [vmem:[%s3] sm:$0xff] %v155
  // Predicated region
  $region14: #{custom_loss.1} parent=0 // pred_check
    _
  $region15: #{custom_loss.1} parent=0 // pred_check_branch
    %158 = sbr.rel (0) target = $region17
  $region16: #{custom_loss.1} parent=0 // pred_region
    _
  $region17: #{custom_loss.1} parent=0 // pred_fallthru
    _
  // Predicated region
  $region18: #{custom_loss.1} parent=0 // pred_check
    _
  $region19: #{custom_loss.1} parent=0 // pred_check_branch
    %160 = sbr.rel (0) target = $region21
  $region20: #{custom_loss.1} parent=0 // pred_region
    _
  $region21: #{custom_loss.1} parent=0 // pred_fallthru
    _

</llo_original>
